<compile_context>
chip_gen: v7x
topology: tpu7x:2x2x1
jax: 0.10.0
libtpu: 0.0.40
codegen_flags: <defaults>
</compile_context>

<pallas_src>
import functools
import math

import jax
import jax.numpy as jnp
import numpy as np
from jax import lax
from jax.experimental import pallas as pl
from jax.experimental.pallas import tpu as pltpu


# ----------------------------- Pallas kernel --------------------------------

def _eca_kernel(x_ref, band_ref, o_ref):
    """Fused ECA: avg-pool + channel conv1d + sigmoid + channel-wise gating.

    x_ref:    (1, C, HW) activation tile (C on sublanes, HW on lanes)
    band_ref: (C, C) banded conv1d matrix, already scaled by 1/HW
    o_ref:    (1, C, HW) gated output
    """
    x = x_ref[0]                                           # (C, HW) f32

    # band @ x summed over HW  ==  conv1d(mean_hw(x))  (linear ops commute).
    # Tiny matmul -> HIGHEST precision is free and keeps the gate accurate.
    conv = jnp.dot(band_ref[...], x,
                   preferred_element_type=jnp.float32,
                   precision=lax.Precision.HIGHEST)        # (C, HW)
    y = jnp.sum(conv, axis=1, keepdims=True)               # (C, 1) cross-lane reduce

    scale = 1.0 / (1.0 + jnp.exp(-y))                      # sigmoid, (C, 1)

    # Lane-broadcast multiply; output tile is lane-dense (last dim = HW).
    o_ref[0] = (x * scale).astype(o_ref.dtype)


# ------------------------------ wrapper --------------------------------------

def eca_kernel_size(channels, gamma=2, b=1):
    """k as defined by EfficientECA.__init__."""
    t = int(abs((math.log(channels, 2) + b) / gamma))
    return t if t % 2 else t + 1


def _banded_conv_matrix(weight, channels, hw):
    """(C, C) matrix B with B[co, ci] = w[ci - co + pad] (zero outside the band),
    scaled by 1/HW so it also performs the adaptive average pool."""
    k = weight.shape[0]
    pad = (k - 1) // 2
    idx = jnp.arange(channels)
    j = idx[None, :] - idx[:, None] + pad                   # j[co, ci] = ci - co + pad
    band = jnp.where((j >= 0) & (j < k),
                     weight[jnp.clip(j, 0, k - 1)],
                     jnp.float32(0.0)).astype(jnp.float32)
    return band * (1.0 / hw)


def efficient_eca(x_nchw, weight):
    """EfficientECA.forward.  x_nchw: (N, C, H, W); weight: (k,) conv1d taps."""
    n, c, h, w = x_nchw.shape
    hw = h * w
    band = _banded_conv_matrix(weight, c, hw)               # (C, C), tiny

    x3 = x_nchw.reshape(n, c, hw)                           # free reshape (contiguous)

    # Derived VMEM budget: 2x double-buffered in + out blocks + band + headroom,
    # kept well under v7x's 64 MiB per-core VMEM.
    blk_bytes = c * hw * x3.dtype.itemsize
    vmem_budget = min(48 * 1024 * 1024,
                      max(4 * 1024 * 1024, 6 * blk_bytes + 2 * c * c * 4))

    out = pl.pallas_call(
        _eca_kernel,
        out_shape=jax.ShapeDtypeStruct((n, c, hw), x_nchw.dtype),
        grid=(n,),
        in_specs=[
            pl.BlockSpec((1, c, hw), lambda i: (i, 0, 0)),
            pl.BlockSpec((c, c), lambda i: (0, 0)),         # resident across grid
        ],
        out_specs=pl.BlockSpec((1, c, hw), lambda i: (i, 0, 0)),
        compiler_params=pltpu.CompilerParams(
            dimension_semantics=("parallel",),
            vmem_limit_bytes=int(vmem_budget)),
    )(x3, band)
    return out.reshape(n, c, h, w)


# --------------------------- pure-JAX reference -------------------------------

def eca_reference(x, weight):
    n, c, h, w = x.shape
    k = weight.shape[0]
    pad = (k - 1) // 2
    m = jnp.mean(x, axis=(2, 3))                            # (N, C) adaptive avg pool
    mp = jnp.pad(m, ((0, 0), (pad, pad)))                   # zero-padded conv1d
    y = jnp.zeros_like(m)
    for j in range(k):
        y = y + weight[j] * mp[:, j:j + c]
    s = 1.0 / (1.0 + jnp.exp(-y))
    return x * s[:, :, None, None]


# ----------------------------------- main ------------------------------------

if __name__ == "__main__":
    key = jax.random.PRNGKey(0)
    k_x, k_w = jax.random.split(key)

    N, C, H, W = 2, 64, 16, 16                              # small ECA-style feature map
    x = jax.random.normal(k_x, (N, C, H, W), jnp.float32)

    k = eca_kernel_size(C)                                  # C=64 -> k=3
    weight = jax.random.normal(k_w, (k,), jnp.float32) * (1.0 / k) ** 0.5

    out = jax.jit(efficient_eca)(x, weight)
    jax.block_until_ready(out)

    ref = jax.jit(eca_reference)(x, weight)
    jax.block_until_ready(ref)

    assert out.shape == x.shape, (out.shape, x.shape)
    np.testing.assert_allclose(np.asarray(out), np.asarray(ref),
                               rtol=1e-4, atol=1e-5)

    print("KERNEL_OK")
</pallas_src>

<mosaic_0001>
module attributes {stable_mosaic.version = 11 : i64} {
  func.func @_eca_kernel(%arg0: i32, %arg1: memref<1x64x256xf32, #tpu.memory_space<vmem>>, %arg2: memref<64x64xf32, #tpu.memory_space<vmem>>, %arg3: memref<1x64x256xf32, #tpu.memory_space<vmem>>) attributes {dimension_semantics = [#tpu.dimension_semantics<parallel>], iteration_bounds = array<i64: 2>, scalar_prefetch = 0 : i64, scratch_operands = 0 : i64, tpu.core_type = #tpu.core_type<tc>, window_params = [{transform_indices = @transform_0, window_bounds = array<i64: 1, 64, 256>}, {pipeline_mode = #tpu.pipeline_mode<synchronous>, transform_indices = @transform_1, window_bounds = array<i64: 64, 64>}, {transform_indices = @transform_2, window_bounds = array<i64: 1, 64, 256>}]} {
    %c0 = arith.constant 0 : index
    %c0_0 = arith.constant 0 : index
    %c0_1 = arith.constant 0 : index
    %0 = vector.load %arg1[%c0, %c0_0, %c0_1] : memref<1x64x256xf32, #tpu.memory_space<vmem>>, vector<1x64x256xf32>
    %1 = vector.shape_cast %0 : vector<1x64x256xf32> to vector<64x256xf32>
    %c0_2 = arith.constant 0 : index
    %c0_3 = arith.constant 0 : index
    %2 = vector.load %arg2[%c0_2, %c0_3] : memref<64x64xf32, #tpu.memory_space<vmem>>, vector<64x64xf32>
    %cst = arith.constant dense<0.000000e+00> : vector<64x256xf32>
    %3 = tpu.matmul %2, %1, %cst {dimension_numbers = #tpu.dot_dimension_numbers<[1], [0], [0], [1], [0, 0, 1, 1], [], []>, precision = #tpu.contract_precision<fp32>} : vector<64x64xf32>, vector<64x256xf32>, vector<64x256xf32> -> vector<64x256xf32>
    %cst_4 = arith.constant dense<0.000000e+00> : vector<64xf32>
    %4 = vector.multi_reduction <add>, %3, %cst_4 [1] : vector<64x256xf32> to vector<64xf32>
    %5 = vector.shape_cast %4 : vector<64xf32> to vector<64x1xf32>
    %cst_5 = arith.constant 0.000000e+00 : f32
    %6 = vector.broadcast %cst_5 : f32 to vector<64x1xf32>
    %7 = arith.subf %6, %5 : vector<64x1xf32>
    %8 = math.exp %7 : vector<64x1xf32>
    %cst_6 = arith.constant 1.000000e+00 : f32
    %9 = vector.broadcast %cst_6 : f32 to vector<64x1xf32>
    %10 = arith.addf %9, %8 : vector<64x1xf32>
    %cst_7 = arith.constant 1.000000e+00 : f32
    %11 = vector.broadcast %cst_7 : f32 to vector<64x1xf32>
    %12 = arith.divf %11, %10 : vector<64x1xf32>
    %13 = vector.broadcast %12 : vector<64x1xf32> to vector<64x256xf32>
    %14 = arith.mulf %1, %13 : vector<64x256xf32>
    %c0_8 = arith.constant 0 : index
    %c0_9 = arith.constant 0 : index
    %c0_10 = arith.constant 0 : index
    %15 = vector.load %arg3[%c0_8, %c0_9, %c0_10] : memref<1x64x256xf32, #tpu.memory_space<vmem>>, vector<1x64x256xf32>
    %16 = vector.shape_cast %15 : vector<1x64x256xf32> to vector<64x256xf32>
    %17 = vector.shape_cast %14 : vector<64x256xf32> to vector<1x64x256xf32>
    tpu.vector_store %arg3[%c0_8, %c0_9, %c0_10], %17 {strides = array<i32>} : memref<1x64x256xf32, #tpu.memory_space<vmem>>, vector<1x64x256xf32>,
    return
  }
  func.func @transform_0(%arg0: i32) -> (i32, i32, i32) {
    %c0_i32 = arith.constant 0 : i32
    %c0_i32_0 = arith.constant 0 : i32
    %c0_i32_1 = arith.constant 0 : i32
    return %arg0, %c0_i32, %c0_i32_0 : i32, i32, i32
  }
  func.func @transform_1(%arg0: i32) -> (i32, i32) {
    %c0_i32 = arith.constant 0 : i32
    %c0_i32_0 = arith.constant 0 : i32
    %c0_i32_1 = arith.constant 0 : i32
    return %c0_i32, %c0_i32_0 : i32, i32
  }
  func.func @transform_2(%arg0: i32) -> (i32, i32, i32) {
    %c0_i32 = arith.constant 0 : i32
    %c0_i32_0 = arith.constant 0 : i32
    %c0_i32_1 = arith.constant 0 : i32
    return %arg0, %c0_i32, %c0_i32_0 : i32, i32, i32
  }
}

</mosaic_0001>

<llo_original>
// kernel: efficient_eca.1
$region0: #{efficient_eca.1}
  #allocation0 [shape = 'u32[]', space=smem, size = 0x4, offset = 0x4, fixed_abs, tag = 'smem constant byte address 0x4 - core index']
  #allocation1 [shape = 'u32[144,128]{1,0:T(1,128)}', space=vmem, size = 0x12000, scoped, tag = 'internal scratch']
  %s0 = inlined_call_operand.vmem [shape: f32[2,64,256], index: 0, kind: input, shape index: {}]
  %s1 = inlined_call_operand.vmem [shape: f32[64,64], index: 1, kind: input, shape index: {}]
  %s2 = inlined_call_operand.vmem [shape: f32[2,64,256], index: 2, kind: output, shape index: {}]
  %s3 = sld [smem:[#allocation0]]
  $region41: #{efficient_eca.1} parent=0
    _
  %s5 = ssub.s32 1, %s3
  %s6 = scalar_select 0, %s5, %s3
  loop: start=0, step=1, limit=4
  $region2: #{efficient_eca.1} parent=0 // loop_pre_header
    _
  $region3: #{efficient_eca.1} parent=0 // loop_header
    %s8 = sphi 0, %s12
    %p9 = scmp.ge.s32.totalorder %s8, 4
    %s18 = sphi 0, %s20
    %s21 = sphi 0, %s18
    %s22 = sphi 0, %s21
    %s38 = sphi 0, %s22
    %s42 = sphi 0, %s42
    %s44 = sphi 0, %s42
    %s45 = sphi 0, %s44
    %s59 = sphi 0, %s45
    %s65 = sphi 0, %s67
    %s68 = sphi 0, %s65
    %s69 = sphi 0, %s68
    %s85 = sphi 0, %s69
  $region4: #{efficient_eca.1} parent=0 // loop_header_branch
    %11 = sbr.rel (%p9) target = $region8
  $region5: #{efficient_eca.1} parent=0 // loop_body
    %s13 = ssub.s32 %s8, 1
    %s14 = ssub.s32 %s8, 2
    %s15 = sadd.s32 %s8, 1
    %s16 = ssub.s32 %s8, %s15
    %p17 = scmp.eq.s32.totalorder %s16, 0
    %s19 = sadd.s32 %s18, 1
    %s20 = scalar_select %p17, %s18, %s19
    %p23 = pneg %p17
    %p24 = scmp.eq.s32.totalorder %s8, 1
    %p25 = por %p23, %p24
    %p26 = scmp.ne.s32.totalorder %s18, %s21
    %p27 = scmp.eq.s32.totalorder %s8, 0
    %p28 = por %p26, %p27
    %p29 = scmp.ne.s32.totalorder %s18, %s21
    %p30 = scmp.eq.s32.totalorder %s13, 1
    %p31 = por %p29, %p30
    %p32 = scmp.ne.s32.totalorder %s21, %s22
    %p33 = scmp.eq.s32.totalorder %s13, 0
    %p34 = por %p32, %p33
    %p35 = scmp.ne.s32.totalorder %s21, %s22
    %p36 = scmp.eq.s32.totalorder %s14, 1
    %p37 = por %p35, %p36
    %p39 = scmp.ne.s32.totalorder %s22, %s38
    %p40 = scmp.eq.s32.totalorder %s14, 0
    %p41 = por %p39, %p40
    %s43 = sadd.s32 %s42, 1
    %p46 = scmp.eq.s32.totalorder %s8, 1
    %p47 = scmp.ne.s32.totalorder %s42, %s44
    %p48 = scmp.eq.s32.totalorder %s8, 0
    %p49 = por %p47, %p48
    %p50 = scmp.ne.s32.totalorder %s42, %s44
    %p51 = scmp.eq.s32.totalorder %s13, 1
    %p52 = por %p50, %p51
    %p53 = scmp.ne.s32.totalorder %s44, %s45
    %p54 = scmp.eq.s32.totalorder %s13, 0
    %p55 = por %p53, %p54
    %p56 = scmp.ne.s32.totalorder %s44, %s45
    %p57 = scmp.eq.s32.totalorder %s14, 1
    %p58 = por %p56, %p57
    %p60 = scmp.ne.s32.totalorder %s45, %s59
    %p61 = scmp.eq.s32.totalorder %s14, 0
    %p62 = por %p60, %p61
    %s63 = ssub.s32 %s8, %s15
    %p64 = scmp.eq.s32.totalorder %s63, 0
    %s66 = sadd.s32 %s65, 1
    %s67 = scalar_select %p64, %s65, %s66
    %p70 = pneg %p64
    %p71 = scmp.eq.s32.totalorder %s8, 1
    %p72 = por %p70, %p71
    %p73 = scmp.ne.s32.totalorder %s65, %s68
    %p74 = scmp.eq.s32.totalorder %s8, 0
    %p75 = por %p73, %p74
    %p76 = scmp.ne.s32.totalorder %s65, %s68
    %p77 = scmp.eq.s32.totalorder %s13, 1
    %p78 = por %p76, %p77
    %p79 = scmp.ne.s32.totalorder %s68, %s69
    %p80 = scmp.eq.s32.totalorder %s13, 0
    %p81 = por %p79, %p80
    %p82 = scmp.ne.s32.totalorder %s68, %s69
    %p83 = scmp.eq.s32.totalorder %s14, 1
    %p84 = por %p82, %p83
    %p86 = scmp.ne.s32.totalorder %s69, %s85
    %p87 = scmp.eq.s32.totalorder %s14, 0
    %p88 = por %p86, %p87
    %p89 = scmp.le.s32.totalorder 1, %s8
    %p90 = scmp.lt.s32.totalorder %s8, 3
    %p91 = pnand %p89, %p90
    %p92 = pneg %p91
    // Predicated region
    $region9: #{efficient_eca.1} parent=5 // pred_check
      _
    $region10: #{efficient_eca.1} parent=5 // pred_check_branch
      %94 = sbr.rel (%p91) target = $region12
    $region11: #{efficient_eca.1} parent=5 // pred_region
      %s95 = ssub.s32 %s8, 1
      // Predicated region
      $region13: #{efficient_eca.1} parent=11 // pred_check
        %p96 = pneg %p55
      $region14: #{efficient_eca.1} parent=11 // pred_check_branch
        %98 = sbr.rel (%p96) target = $region16
      $region15: #{efficient_eca.1} parent=11 // pred_region
        _
      $region16: #{efficient_eca.1} parent=11 // pred_fallthru
        _
    $region12: #{efficient_eca.1} parent=5 // pred_fallthru
      _
    %p99 = scmp.lt.s32.totalorder %s8, 2
    // Predicated region
    $region17: #{efficient_eca.1} parent=5 // pred_check
      %p100 = pneg %p99
    $region18: #{efficient_eca.1} parent=5 // pred_check_branch
      %102 = sbr.rel (%p100) target = $region20
    $region19: #{efficient_eca.1} parent=5 // pred_region
      // Predicated region
      $region21: #{efficient_eca.1} parent=19 // pred_check
        %p103 = pneg %p28
      $region22: #{efficient_eca.1} parent=19 // pred_check_branch
        %105 = sbr.rel (%p103) target = $region24
      $region23: #{efficient_eca.1} parent=19 // pred_region
        %p106 = scmp.lt.s32.totalorder %s8, 1
        %s107 = scalar_select %p106, %s8, 1
        %s108 = smul.addr %s107, 16
        %s109 = smul.addr %s108, 8
        %s110 = scalar_lea.vmem %s0, %s109
      $region24: #{efficient_eca.1} parent=19 // pred_fallthru
        _
    $region20: #{efficient_eca.1} parent=5 // pred_fallthru
      _
    %p111 = scmp.le.s32.totalorder 1, %s8
    %p112 = scmp.lt.s32.totalorder %s8, 3
    %p113 = pnand %p111, %p112
    %p114 = pneg %p113
    // Predicated region
    $region25: #{efficient_eca.1} parent=5 // pred_check
      _
    $region26: #{efficient_eca.1} parent=5 // pred_check_branch
      %116 = sbr.rel (%p113) target = $region28
    $region27: #{efficient_eca.1} parent=5 // pred_region
      %s117 = ssub.s32 %s8, 1
      %p118 = scmp.lt.s32.totalorder %s13, 1
      %s119 = scalar_select %p118, %s13, 1
      %s120 = smul.addr %s119, 16
      %s121 = smul.addr %s120, 8
      %s122 = scalar_lea.vmem %s0, %s121
      %p123 = pneg %p34
      %p124 = pneg %p31
      %p125 = pneg %p55
      %p126 = pneg %p52
      %p127 = pneg %p81
      %p128 = pneg %p78
      %p129 = scmp.lt.s32.totalorder %s13, 1
      %s130 = scalar_select %p129, %s13, 1
      %s131 = smul.addr %s130, 16
      %s132 = smul.addr %s131, 8
      %s133 = scalar_lea.vmem %s2, %s132
      %p134 = scmp.lt.s32.totalorder %s13, 1
      %s135 = scalar_select %p134, %s13, 1
      %s136 = smul.addr %s135, 16
      %s137 = smul.addr %s136, 8
      %s138 = scalar_lea.vmem %s0, %s137
      %p139 = scmp.lt.s32.totalorder %s13, 1
      %s140 = scalar_select %p139, %s13, 1
      %s141 = smul.addr %s140, 16
      %s142 = smul.addr %s141, 8
      %s143 = scalar_lea.vmem %s2, %s142
      %v144 = vld [vmem:[%s138] sm:$0xff]
      %v145 = vld [vmem:[%s138 + $0x8] sm:$0xff]
      %v146 = vld [vmem:[%s138 + $0x10] sm:$0xff]
      %v147 = vld [vmem:[%s138 + $0x18] sm:$0xff]
      %v148 = vld [vmem:[%s138 + $0x20] sm:$0xff]
      %v149 = vld [vmem:[%s138 + $0x28] sm:$0xff]
      %v150 = vld [vmem:[%s138 + $0x30] sm:$0xff]
      %v151 = vld [vmem:[%s138 + $0x38] sm:$0xff]
      %v152 = vld [vmem:[%s138 + $0x40] sm:$0xff]
      %v153 = vld [vmem:[%s138 + $0x48] sm:$0xff]
      %v154 = vld [vmem:[%s138 + $0x50] sm:$0xff]
      %v155 = vld [vmem:[%s138 + $0x58] sm:$0xff]
      %v156 = vld [vmem:[%s138 + $0x60] sm:$0xff]
      %v157 = vld [vmem:[%s138 + $0x68] sm:$0xff]
      %v158 = vld [vmem:[%s138 + $0x70] sm:$0xff]
      %v159 = vld [vmem:[%s138 + $0x78] sm:$0xff]
      %v160 = vld [vmem:[%s1] sm:$0xff]
      %v161 = vld [vmem:[%s1 + $0x8] sm:$0xff]
      %v162 = vld [vmem:[%s1 + $0x10] sm:$0xff]
      %v163 = vld [vmem:[%s1 + $0x18] sm:$0xff]
      %v164 = vld [vmem:[%s1 + $0x20] sm:$0xff]
      %v165 = vld [vmem:[%s1 + $0x28] sm:$0xff]
      %v166 = vld [vmem:[%s1 + $0x30] sm:$0xff]
      %v167 = vld [vmem:[%s1 + $0x38] sm:$0xff]
      %vm168 = vcmask 523264
      %v170 = vsel %vm168, %v160, 0
      %v173 = vsel %vm168, %v161, 0
      %v176 = vsel %vm168, %v162, 0
      %v179 = vsel %vm168, %v163, 0
      %v182 = vsel %vm168, %v164, 0
      %v185 = vsel %vm168, %v165, 0
      %v188 = vsel %vm168, %v166, 0
      %v191 = vsel %vm168, %v167, 0
      %v193 = vand.u32 %v145, 4294901760
      %194 = vmatprep.subr.mxu0 %v193
      %v195 = vand.u32 %v144, 4294901760
      %196 = vmatpush1.msra.mxu0 %v195
      %v197 = vand.u32 %v147, 4294901760
      %198 = vmatprep.subr.mxu0 %v197
      %v199 = vand.u32 %v146, 4294901760
      %200 = vmatpush1.msra.mxu0 %v199
      %v201 = vand.u32 %v149, 4294901760
      %202 = vmatprep.subr.mxu0 %v201
      %v203 = vand.u32 %v148, 4294901760
      %204 = vmatpush1.msra.mxu0 %v203
      %v205 = vand.u32 %v151, 4294901760
      %206 = vmatprep.subr.mxu0 %v205
      %v207 = vand.u32 %v150, 4294901760
      %208 = vmatpush1.msra.mxu0 %v207
      %v209 = vand.u32 %v153, 4294901760
      %210 = vmatprep.subr.mxu0 %v209
      %v211 = vand.u32 %v152, 4294901760
      %212 = vmatpush1.msra.mxu0 %v211
      %v213 = vand.u32 %v155, 4294901760
      %214 = vmatprep.subr.mxu0 %v213
      %v215 = vand.u32 %v154, 4294901760
      %216 = vmatpush1.msra.mxu0 %v215
      %v217 = vand.u32 %v157, 4294901760
      %218 = vmatprep.subr.mxu0 %v217
      %v219 = vand.u32 %v156, 4294901760
      %220 = vmatpush1.msra.mxu0 %v219
      %v221 = vand.u32 %v159, 4294901760
      %222 = vmatprep.subr.mxu0 %v221
      %v223 = vand.u32 %v158, 4294901760
      %224 = vmatpush1.msra.mxu0 %v223
      %225 = vmatprep.subr.mxu0 0.0
      %226 = vmatpush1.msra.mxu0 0.0
      %227 = vmatprep.subr.mxu0 0.0
      %228 = vmatpush1.msra.mxu0 0.0
      %229 = vmatprep.subr.mxu0 0.0
      %230 = vmatpush1.msra.mxu0 0.0
      %231 = vmatprep.subr.mxu0 0.0
      %232 = vmatpush1.msra.mxu0 0.0
      %233 = vmatprep.subr.mxu0 0.0
      %234 = vmatpush1.msra.mxu0 0.0
      %235 = vmatprep.subr.mxu0 0.0
      %236 = vmatpush1.msra.mxu0 0.0
      %237 = vmatprep.subr.mxu0 0.0
      %238 = vmatpush1.msra.mxu0 0.0
      %239 = vmatprep.subr.mxu0 0.0
      %240 = vmatpush1.msra.mxu0 0.0
      %241 = vmatprep.subr.mxu0 0.0
      %242 = vmatpush1.msra.mxu0 0.0
      %243 = vmatprep.subr.mxu0 0.0
      %244 = vmatpush1.msra.mxu0 0.0
      %245 = vmatprep.subr.mxu0 0.0
      %246 = vmatpush1.msra.mxu0 0.0
      %247 = vmatprep.subr.mxu0 0.0
      %248 = vmatpush1.msra.mxu0 0.0
      %249 = vmatprep.subr.mxu0 0.0
      %250 = vmatpush1.msra.mxu0 0.0
      %251 = vmatprep.subr.mxu0 0.0
      %252 = vmatpush1.msra.mxu0 0.0
      %253 = vmatprep.subr.mxu0 0.0
      %254 = vmatpush1.msra.mxu0 0.0
      %255 = vmatprep.subr.mxu0 0.0
      %256 = vmatpush1.msra.mxu0 0.0
      %257 = vmatprep.subr.mxu0 0.0
      %258 = vmatpush1.msra.mxu0 0.0
      %259 = vmatprep.subr.mxu0 0.0
      %260 = vmatpush1.msra.mxu0 0.0
      %261 = vmatprep.subr.mxu0 0.0
      %262 = vmatpush1.msra.mxu0 0.0
      %263 = vmatprep.subr.mxu0 0.0
      %264 = vmatpush1.msra.mxu0 0.0
      %265 = vmatprep.subr.mxu0 0.0
      %266 = vmatpush1.msra.mxu0 0.0
      %267 = vmatprep.subr.mxu0 0.0
      %268 = vmatpush1.msra.mxu0 0.0
      %269 = vmatprep.subr.mxu0 0.0
      %270 = vmatpush1.msra.mxu0 0.0
      %271 = vmatprep.subr.mxu0 0.0
      %272 = vmatpush1.msra.mxu0 0.0
      %273 = vmatprep.mubr.f32.mxu0 0.0
      %v274 = vand.u32 %v170, 4294901760
      %v275 = vsub.f32 %v170, %v274
      %v276 = vand.u32 %v275, 4294901760
      %v277 = vsub.f32 %v275, %v276
      %v278 = vand.u32 %v277, 4294901760
      %279 = vmatmul.mubr.f32.gmra.mrb[0].mxu0 %v278
      %v280 = vpop.f32.mrb[0].mxu0
      %v281 = vadd.f32 0.0, %v280
      %v282 = vpop.f32.mrb[0].mxu0
      %v283 = vadd.f32 0.0, %v282
      %284 = vmatprep.mubr.f32.mxu0 0.0
      %v285 = vand.u32 %v173, 4294901760
      %v286 = vsub.f32 %v173, %v285
      %v287 = vand.u32 %v286, 4294901760
      %v288 = vsub.f32 %v286, %v287
      %v289 = vand.u32 %v288, 4294901760
      %290 = vmatmul.mubr.f32.gmra.mrb[0].mxu0 %v289
      %v291 = vpop.f32.mrb[0].mxu0
      %v292 = vadd.f32 0.0, %v291
      %v293 = vpop.f32.mrb[0].mxu0
      %v294 = vadd.f32 0.0, %v293
      %295 = vmatprep.mubr.f32.mxu0 0.0
      %v296 = vand.u32 %v176, 4294901760
      %v297 = vsub.f32 %v176, %v296
      %v298 = vand.u32 %v297, 4294901760
      %v299 = vsub.f32 %v297, %v298
      %v300 = vand.u32 %v299, 4294901760
      %301 = vmatmul.mubr.f32.gmra.mrb[0].mxu0 %v300
      %v302 = vpop.f32.mrb[0].mxu0
      %v303 = vadd.f32 0.0, %v302
      %v304 = vpop.f32.mrb[0].mxu0
      %v305 = vadd.f32 0.0, %v304
      %306 = vmatprep.mubr.f32.mxu0 0.0
      %v307 = vand.u32 %v179, 4294901760
      %v308 = vsub.f32 %v179, %v307
      %v309 = vand.u32 %v308, 4294901760
      %v310 = vsub.f32 %v308, %v309
      %v311 = vand.u32 %v310, 4294901760
      %312 = vmatmul.mubr.f32.gmra.mrb[0].mxu0 %v311
      %v313 = vpop.f32.mrb[0].mxu0
      %v314 = vadd.f32 0.0, %v313
      %v315 = vpop.f32.mrb[0].mxu0
      %v316 = vadd.f32 0.0, %v315
      %317 = vmatprep.mubr.f32.mxu0 0.0
      %v318 = vand.u32 %v182, 4294901760
      %v319 = vsub.f32 %v182, %v318
      %v320 = vand.u32 %v319, 4294901760
      %v321 = vsub.f32 %v319, %v320
      %v322 = vand.u32 %v321, 4294901760
      %323 = vmatmul.mubr.f32.gmra.mrb[0].mxu0 %v322
      %v324 = vpop.f32.mrb[0].mxu0
      %v325 = vadd.f32 0.0, %v324
      %v326 = vpop.f32.mrb[0].mxu0
      %v327 = vadd.f32 0.0, %v326
      %328 = vmatprep.mubr.f32.mxu0 0.0
      %v329 = vand.u32 %v185, 4294901760
      %v330 = vsub.f32 %v185, %v329
      %v331 = vand.u32 %v330, 4294901760
      %v332 = vsub.f32 %v330, %v331
      %v333 = vand.u32 %v332, 4294901760
      %334 = vmatmul.mubr.f32.gmra.mrb[0].mxu0 %v333
      %v335 = vpop.f32.mrb[0].mxu0
      %v336 = vadd.f32 0.0, %v335
      %v337 = vpop.f32.mrb[0].mxu0
      %v338 = vadd.f32 0.0, %v337
      %339 = vmatprep.mubr.f32.mxu0 0.0
      %v340 = vand.u32 %v188, 4294901760
      %v341 = vsub.f32 %v188, %v340
      %v342 = vand.u32 %v341, 4294901760
      %v343 = vsub.f32 %v341, %v342
      %v344 = vand.u32 %v343, 4294901760
      %345 = vmatmul.mubr.f32.gmra.mrb[0].mxu0 %v344
      %v346 = vpop.f32.mrb[0].mxu0
      %v347 = vadd.f32 0.0, %v346
      %v348 = vpop.f32.mrb[0].mxu0
      %v349 = vadd.f32 0.0, %v348
      %350 = vmatprep.mubr.f32.mxu0 0.0
      %v351 = vand.u32 %v191, 4294901760
      %v352 = vsub.f32 %v191, %v351
      %v353 = vand.u32 %v352, 4294901760
      %v354 = vsub.f32 %v352, %v353
      %v355 = vand.u32 %v354, 4294901760
      %356 = vmatmul.mubr.f32.gmra.mrb[0].mxu0 %v355
      %v357 = vpop.f32.mrb[0].mxu0
      %v358 = vadd.f32 0.0, %v357
      %v359 = vpop.f32.mrb[0].mxu0
      %v360 = vadd.f32 0.0, %v359
      %361 = vdwg.mxu0
      %v362 = vand.u32 %v145, 4294901760
      %v363 = vsub.f32 %v145, %v362
      %v364 = vand.u32 %v363, 4294901760
      %v365 = vsub.f32 %v363, %v364
      %v366 = vand.u32 %v365, 4294901760
      %367 = vmatprep.subr.mxu0 %v366
      %v368 = vand.u32 %v144, 4294901760
      %v369 = vsub.f32 %v144, %v368
      %v370 = vand.u32 %v369, 4294901760
      %v371 = vsub.f32 %v369, %v370
      %v372 = vand.u32 %v371, 4294901760
      %373 = vmatpush1.msra.mxu0 %v372
      %v374 = vand.u32 %v147, 4294901760
      %v375 = vsub.f32 %v147, %v374
      %v376 = vand.u32 %v375, 4294901760
      %v377 = vsub.f32 %v375, %v376
      %v378 = vand.u32 %v377, 4294901760
      %379 = vmatprep.subr.mxu0 %v378
      %v380 = vand.u32 %v146, 4294901760
      %v381 = vsub.f32 %v146, %v380
      %v382 = vand.u32 %v381, 4294901760
      %v383 = vsub.f32 %v381, %v382
      %v384 = vand.u32 %v383, 4294901760
      %385 = vmatpush1.msra.mxu0 %v384
      %v386 = vand.u32 %v149, 4294901760
      %v387 = vsub.f32 %v149, %v386
      %v388 = vand.u32 %v387, 4294901760
      %v389 = vsub.f32 %v387, %v388
      %v390 = vand.u32 %v389, 4294901760
      %391 = vmatprep.subr.mxu0 %v390
      %v392 = vand.u32 %v148, 4294901760
      %v393 = vsub.f32 %v148, %v392
      %v394 = vand.u32 %v393, 4294901760
      %v395 = vsub.f32 %v393, %v394
      %v396 = vand.u32 %v395, 4294901760
      %397 = vmatpush1.msra.mxu0 %v396
      %v398 = vand.u32 %v151, 4294901760
      %v399 = vsub.f32 %v151, %v398
      %v400 = vand.u32 %v399, 4294901760
      %v401 = vsub.f32 %v399, %v400
      %v402 = vand.u32 %v401, 4294901760
      %403 = vmatprep.subr.mxu0 %v402
      %v404 = vand.u32 %v150, 4294901760
      %v405 = vsub.f32 %v150, %v404
      %v406 = vand.u32 %v405, 4294901760
      %v407 = vsub.f32 %v405, %v406
      %v408 = vand.u32 %v407, 4294901760
      %409 = vmatpush1.msra.mxu0 %v408
      %v410 = vand.u32 %v153, 4294901760
      %v411 = vsub.f32 %v153, %v410
      %v412 = vand.u32 %v411, 4294901760
      %v413 = vsub.f32 %v411, %v412
      %v414 = vand.u32 %v413, 4294901760
      %415 = vmatprep.subr.mxu0 %v414
      %v416 = vand.u32 %v152, 4294901760
      %v417 = vsub.f32 %v152, %v416
      %v418 = vand.u32 %v417, 4294901760
      %v419 = vsub.f32 %v417, %v418
      %v420 = vand.u32 %v419, 4294901760
      %421 = vmatpush1.msra.mxu0 %v420
      %v422 = vand.u32 %v155, 4294901760
      %v423 = vsub.f32 %v155, %v422
      %v424 = vand.u32 %v423, 4294901760
      %v425 = vsub.f32 %v423, %v424
      %v426 = vand.u32 %v425, 4294901760
      %427 = vmatprep.subr.mxu0 %v426
      %v428 = vand.u32 %v154, 4294901760
      %v429 = vsub.f32 %v154, %v428
      %v430 = vand.u32 %v429, 4294901760
      %v431 = vsub.f32 %v429, %v430
      %v432 = vand.u32 %v431, 4294901760
      %433 = vmatpush1.msra.mxu0 %v432
      %v434 = vand.u32 %v157, 4294901760
      %v435 = vsub.f32 %v157, %v434
      %v436 = vand.u32 %v435, 4294901760
      %v437 = vsub.f32 %v435, %v436
      %v438 = vand.u32 %v437, 4294901760
      %439 = vmatprep.subr.mxu0 %v438
      %v440 = vand.u32 %v156, 4294901760
      %v441 = vsub.f32 %v156, %v440
      %v442 = vand.u32 %v441, 4294901760
      %v443 = vsub.f32 %v441, %v442
      %v444 = vand.u32 %v443, 4294901760
      %445 = vmatpush1.msra.mxu0 %v444
      %v446 = vand.u32 %v159, 4294901760
      %v447 = vsub.f32 %v159, %v446
      %v448 = vand.u32 %v447, 4294901760
      %v449 = vsub.f32 %v447, %v448
      %v450 = vand.u32 %v449, 4294901760
      %451 = vmatprep.subr.mxu0 %v450
      %v452 = vand.u32 %v158, 4294901760
      %v453 = vsub.f32 %v158, %v452
      %v454 = vand.u32 %v453, 4294901760
      %v455 = vsub.f32 %v453, %v454
      %v456 = vand.u32 %v455, 4294901760
      %457 = vmatpush1.msra.mxu0 %v456
      %458 = vmatprep.subr.mxu0 0.0
      %459 = vmatpush1.msra.mxu0 0.0
      %460 = vmatprep.subr.mxu0 0.0
      %461 = vmatpush1.msra.mxu0 0.0
      %462 = vmatprep.subr.mxu0 0.0
      %463 = vmatpush1.msra.mxu0 0.0
      %464 = vmatprep.subr.mxu0 0.0
      %465 = vmatpush1.msra.mxu0 0.0
      %466 = vmatprep.subr.mxu0 0.0
      %467 = vmatpush1.msra.mxu0 0.0
      %468 = vmatprep.subr.mxu0 0.0
      %469 = vmatpush1.msra.mxu0 0.0
      %470 = vmatprep.subr.mxu0 0.0
      %471 = vmatpush1.msra.mxu0 0.0
      %472 = vmatprep.subr.mxu0 0.0
      %473 = vmatpush1.msra.mxu0 0.0
      %474 = vmatprep.subr.mxu0 0.0
      %475 = vmatpush1.msra.mxu0 0.0
      %476 = vmatprep.subr.mxu0 0.0
      %477 = vmatpush1.msra.mxu0 0.0
      %478 = vmatprep.subr.mxu0 0.0
      %479 = vmatpush1.msra.mxu0 0.0
      %480 = vmatprep.subr.mxu0 0.0
      %481 = vmatpush1.msra.mxu0 0.0
      %482 = vmatprep.subr.mxu0 0.0
      %483 = vmatpush1.msra.mxu0 0.0
      %484 = vmatprep.subr.mxu0 0.0
      %485 = vmatpush1.msra.mxu0 0.0
      %486 = vmatprep.subr.mxu0 0.0
      %487 = vmatpush1.msra.mxu0 0.0
      %488 = vmatprep.subr.mxu0 0.0
      %489 = vmatpush1.msra.mxu0 0.0
      %490 = vmatprep.subr.mxu0 0.0
      %491 = vmatpush1.msra.mxu0 0.0
      %492 = vmatprep.subr.mxu0 0.0
      %493 = vmatpush1.msra.mxu0 0.0
      %494 = vmatprep.subr.mxu0 0.0
      %495 = vmatpush1.msra.mxu0 0.0
      %496 = vmatprep.subr.mxu0 0.0
      %497 = vmatpush1.msra.mxu0 0.0
      %498 = vmatprep.subr.mxu0 0.0
      %499 = vmatpush1.msra.mxu0 0.0
      %500 = vmatprep.subr.mxu0 0.0
      %501 = vmatpush1.msra.mxu0 0.0
      %502 = vmatprep.subr.mxu0 0.0
      %503 = vmatpush1.msra.mxu0 0.0
      %504 = vmatprep.subr.mxu0 0.0
      %505 = vmatpush1.msra.mxu0 0.0
      %506 = vmatprep.mubr.f32.mxu0 0.0
      %v507 = vand.u32 %v170, 4294901760
      %508 = vmatmul.mubr.f32.gmra.mrb[0].mxu0 %v507
      %v509 = vpop.f32.mrb[0].mxu0
      %v510 = vadd.f32 %v281, %v509
      %v511 = vpop.f32.mrb[0].mxu0
      %v512 = vadd.f32 %v283, %v511
      %513 = vmatprep.mubr.f32.mxu0 0.0
      %v514 = vand.u32 %v173, 4294901760
      %515 = vmatmul.mubr.f32.gmra.mrb[0].mxu0 %v514
      %v516 = vpop.f32.mrb[0].mxu0
      %v517 = vadd.f32 %v292, %v516
      %v518 = vpop.f32.mrb[0].mxu0
      %v519 = vadd.f32 %v294, %v518
      %520 = vmatprep.mubr.f32.mxu0 0.0
      %v521 = vand.u32 %v176, 4294901760
      %522 = vmatmul.mubr.f32.gmra.mrb[0].mxu0 %v521
      %v523 = vpop.f32.mrb[0].mxu0
      %v524 = vadd.f32 %v303, %v523
      %v525 = vpop.f32.mrb[0].mxu0
      %v526 = vadd.f32 %v305, %v525
      %527 = vmatprep.mubr.f32.mxu0 0.0
      %v528 = vand.u32 %v179, 4294901760
      %529 = vmatmul.mubr.f32.gmra.mrb[0].mxu0 %v528
      %v530 = vpop.f32.mrb[0].mxu0
      %v531 = vadd.f32 %v314, %v530
      %v532 = vpop.f32.mrb[0].mxu0
      %v533 = vadd.f32 %v316, %v532
      %534 = vmatprep.mubr.f32.mxu0 0.0
      %v535 = vand.u32 %v182, 4294901760
      %536 = vmatmul.mubr.f32.gmra.mrb[0].mxu0 %v535
      %v537 = vpop.f32.mrb[0].mxu0
      %v538 = vadd.f32 %v325, %v537
      %v539 = vpop.f32.mrb[0].mxu0
      %v540 = vadd.f32 %v327, %v539
      %541 = vmatprep.mubr.f32.mxu0 0.0
      %v542 = vand.u32 %v185, 4294901760
      %543 = vmatmul.mubr.f32.gmra.mrb[0].mxu0 %v542
      %v544 = vpop.f32.mrb[0].mxu0
      %v545 = vadd.f32 %v336, %v544
      %v546 = vpop.f32.mrb[0].mxu0
      %v547 = vadd.f32 %v338, %v546
      %548 = vmatprep.mubr.f32.mxu0 0.0
      %v549 = vand.u32 %v188, 4294901760
      %550 = vmatmul.mubr.f32.gmra.mrb[0].mxu0 %v549
      %v551 = vpop.f32.mrb[0].mxu0
      %v552 = vadd.f32 %v347, %v551
      %v553 = vpop.f32.mrb[0].mxu0
      %v554 = vadd.f32 %v349, %v553
      %555 = vmatprep.mubr.f32.mxu0 0.0
      %v556 = vand.u32 %v191, 4294901760
      %557 = vmatmul.mubr.f32.gmra.mrb[0].mxu0 %v556
      %v558 = vpop.f32.mrb[0].mxu0
      %v559 = vadd.f32 %v358, %v558
      %v560 = vpop.f32.mrb[0].mxu0
      %v561 = vadd.f32 %v360, %v560
      %562 = vdwg.mxu0
      %v563 = vand.u32 %v145, 4294901760
      %v564 = vsub.f32 %v145, %v563
      %565 = vmatprep.subr.mxu0 %v564
      %v566 = vand.u32 %v144, 4294901760
      %v567 = vsub.f32 %v144, %v566
      %568 = vmatpush1.msra.mxu0 %v567
      %v569 = vand.u32 %v147, 4294901760
      %v570 = vsub.f32 %v147, %v569
      %571 = vmatprep.subr.mxu0 %v570
      %v572 = vand.u32 %v146, 4294901760
      %v573 = vsub.f32 %v146, %v572
      %574 = vmatpush1.msra.mxu0 %v573
      %v575 = vand.u32 %v149, 4294901760
      %v576 = vsub.f32 %v149, %v575
      %577 = vmatprep.subr.mxu0 %v576
      %v578 = vand.u32 %v148, 4294901760
      %v579 = vsub.f32 %v148, %v578
      %580 = vmatpush1.msra.mxu0 %v579
      %v581 = vand.u32 %v151, 4294901760
      %v582 = vsub.f32 %v151, %v581
      %583 = vmatprep.subr.mxu0 %v582
      %v584 = vand.u32 %v150, 4294901760
      %v585 = vsub.f32 %v150, %v584
      %586 = vmatpush1.msra.mxu0 %v585
      %v587 = vand.u32 %v153, 4294901760
      %v588 = vsub.f32 %v153, %v587
      %589 = vmatprep.subr.mxu0 %v588
      %v590 = vand.u32 %v152, 4294901760
      %v591 = vsub.f32 %v152, %v590
      %592 = vmatpush1.msra.mxu0 %v591
      %v593 = vand.u32 %v155, 4294901760
      %v594 = vsub.f32 %v155, %v593
      %595 = vmatprep.subr.mxu0 %v594
      %v596 = vand.u32 %v154, 4294901760
      %v597 = vsub.f32 %v154, %v596
      %598 = vmatpush1.msra.mxu0 %v597
      %v599 = vand.u32 %v157, 4294901760
      %v600 = vsub.f32 %v157, %v599
      %601 = vmatprep.subr.mxu0 %v600
      %v602 = vand.u32 %v156, 4294901760
      %v603 = vsub.f32 %v156, %v602
      %604 = vmatpush1.msra.mxu0 %v603
      %v605 = vand.u32 %v159, 4294901760
      %v606 = vsub.f32 %v159, %v605
      %607 = vmatprep.subr.mxu0 %v606
      %v608 = vand.u32 %v158, 4294901760
      %v609 = vsub.f32 %v158, %v608
      %610 = vmatpush1.msra.mxu0 %v609
      %611 = vmatprep.subr.mxu0 0.0
      %612 = vmatpush1.msra.mxu0 0.0
      %613 = vmatprep.subr.mxu0 0.0
      %614 = vmatpush1.msra.mxu0 0.0
      %615 = vmatprep.subr.mxu0 0.0
      %616 = vmatpush1.msra.mxu0 0.0
      %617 = vmatprep.subr.mxu0 0.0
      %618 = vmatpush1.msra.mxu0 0.0
      %619 = vmatprep.subr.mxu0 0.0
      %620 = vmatpush1.msra.mxu0 0.0
      %621 = vmatprep.subr.mxu0 0.0
      %622 = vmatpush1.msra.mxu0 0.0
      %623 = vmatprep.subr.mxu0 0.0
      %624 = vmatpush1.msra.mxu0 0.0
      %625 = vmatprep.subr.mxu0 0.0
      %626 = vmatpush1.msra.mxu0 0.0
      %627 = vmatprep.subr.mxu0 0.0
      %628 = vmatpush1.msra.mxu0 0.0
      %629 = vmatprep.subr.mxu0 0.0
      %630 = vmatpush1.msra.mxu0 0.0
      %631 = vmatprep.subr.mxu0 0.0
      %632 = vmatpush1.msra.mxu0 0.0
      %633 = vmatprep.subr.mxu0 0.0
      %634 = vmatpush1.msra.mxu0 0.0
      %635 = vmatprep.subr.mxu0 0.0
      %636 = vmatpush1.msra.mxu0 0.0
      %637 = vmatprep.subr.mxu0 0.0
      %638 = vmatpush1.msra.mxu0 0.0
      %639 = vmatprep.subr.mxu0 0.0
      %640 = vmatpush1.msra.mxu0 0.0
      %641 = vmatprep.subr.mxu0 0.0
      %642 = vmatpush1.msra.mxu0 0.0
      %643 = vmatprep.subr.mxu0 0.0
      %644 = vmatpush1.msra.mxu0 0.0
      %645 = vmatprep.subr.mxu0 0.0
      %646 = vmatpush1.msra.mxu0 0.0
      %647 = vmatprep.subr.mxu0 0.0
      %648 = vmatpush1.msra.mxu0 0.0
      %649 = vmatprep.subr.mxu0 0.0
      %650 = vmatpush1.msra.mxu0 0.0
      %651 = vmatprep.subr.mxu0 0.0
      %652 = vmatpush1.msra.mxu0 0.0
      %653 = vmatprep.subr.mxu0 0.0
      %654 = vmatpush1.msra.mxu0 0.0
      %655 = vmatprep.subr.mxu0 0.0
      %656 = vmatpush1.msra.mxu0 0.0
      %657 = vmatprep.subr.mxu0 0.0
      %658 = vmatpush1.msra.mxu0 0.0
      %659 = vmatprep.mubr.f32.mxu0 0.0
      %v660 = vand.u32 %v170, 4294901760
      %v661 = vsub.f32 %v170, %v660
      %662 = vmatmul.mubr.f32.gmra.mrb[0].mxu0 %v661
      %v663 = vpop.f32.mrb[0].mxu0
      %v664 = vadd.f32 %v510, %v663
      %v665 = vpop.f32.mrb[0].mxu0
      %v666 = vadd.f32 %v512, %v665
      %667 = vmatprep.mubr.f32.mxu0 0.0
      %v668 = vand.u32 %v173, 4294901760
      %v669 = vsub.f32 %v173, %v668
      %670 = vmatmul.mubr.f32.gmra.mrb[0].mxu0 %v669
      %v671 = vpop.f32.mrb[0].mxu0
      %v672 = vadd.f32 %v517, %v671
      %v673 = vpop.f32.mrb[0].mxu0
      %v674 = vadd.f32 %v519, %v673
      %675 = vmatprep.mubr.f32.mxu0 0.0
      %v676 = vand.u32 %v176, 4294901760
      %v677 = vsub.f32 %v176, %v676
      %678 = vmatmul.mubr.f32.gmra.mrb[0].mxu0 %v677
      %v679 = vpop.f32.mrb[0].mxu0
      %v680 = vadd.f32 %v524, %v679
      %v681 = vpop.f32.mrb[0].mxu0
      %v682 = vadd.f32 %v526, %v681
      %683 = vmatprep.mubr.f32.mxu0 0.0
      %v684 = vand.u32 %v179, 4294901760
      %v685 = vsub.f32 %v179, %v684
      %686 = vmatmul.mubr.f32.gmra.mrb[0].mxu0 %v685
      %v687 = vpop.f32.mrb[0].mxu0
      %v688 = vadd.f32 %v531, %v687
      %v689 = vpop.f32.mrb[0].mxu0
      %v690 = vadd.f32 %v533, %v689
      %691 = vmatprep.mubr.f32.mxu0 0.0
      %v692 = vand.u32 %v182, 4294901760
      %v693 = vsub.f32 %v182, %v692
      %694 = vmatmul.mubr.f32.gmra.mrb[0].mxu0 %v693
      %v695 = vpop.f32.mrb[0].mxu0
      %v696 = vadd.f32 %v538, %v695
      %v697 = vpop.f32.mrb[0].mxu0
      %v698 = vadd.f32 %v540, %v697
      %699 = vmatprep.mubr.f32.mxu0 0.0
      %v700 = vand.u32 %v185, 4294901760
      %v701 = vsub.f32 %v185, %v700
      %702 = vmatmul.mubr.f32.gmra.mrb[0].mxu0 %v701
      %v703 = vpop.f32.mrb[0].mxu0
      %v704 = vadd.f32 %v545, %v703
      %v705 = vpop.f32.mrb[0].mxu0
      %v706 = vadd.f32 %v547, %v705
      %707 = vmatprep.mubr.f32.mxu0 0.0
      %v708 = vand.u32 %v188, 4294901760
      %v709 = vsub.f32 %v188, %v708
      %710 = vmatmul.mubr.f32.gmra.mrb[0].mxu0 %v709
      %v711 = vpop.f32.mrb[0].mxu0
      %v712 = vadd.f32 %v552, %v711
      %v713 = vpop.f32.mrb[0].mxu0
      %v714 = vadd.f32 %v554, %v713
      %715 = vmatprep.mubr.f32.mxu0 0.0
      %v716 = vand.u32 %v191, 4294901760
      %v717 = vsub.f32 %v191, %v716
      %718 = vmatmul.mubr.f32.gmra.mrb[0].mxu0 %v717
      %v719 = vpop.f32.mrb[0].mxu0
      %v720 = vadd.f32 %v559, %v719
      %v721 = vpop.f32.mrb[0].mxu0
      %v722 = vadd.f32 %v561, %v721
      %723 = vdwg.mxu0
      %v724 = vand.u32 %v145, 4294901760
      %725 = vmatprep.subr.mxu0 %v724
      %v726 = vand.u32 %v144, 4294901760
      %727 = vmatpush1.msra.mxu0 %v726
      %v728 = vand.u32 %v147, 4294901760
      %729 = vmatprep.subr.mxu0 %v728
      %v730 = vand.u32 %v146, 4294901760
      %731 = vmatpush1.msra.mxu0 %v730
      %v732 = vand.u32 %v149, 4294901760
      %733 = vmatprep.subr.mxu0 %v732
      %v734 = vand.u32 %v148, 4294901760
      %735 = vmatpush1.msra.mxu0 %v734
      %v736 = vand.u32 %v151, 4294901760
      %737 = vmatprep.subr.mxu0 %v736
      %v738 = vand.u32 %v150, 4294901760
      %739 = vmatpush1.msra.mxu0 %v738
      %v740 = vand.u32 %v153, 4294901760
      %741 = vmatprep.subr.mxu0 %v740
      %v742 = vand.u32 %v152, 4294901760
      %743 = vmatpush1.msra.mxu0 %v742
      %v744 = vand.u32 %v155, 4294901760
      %745 = vmatprep.subr.mxu0 %v744
      %v746 = vand.u32 %v154, 4294901760
      %747 = vmatpush1.msra.mxu0 %v746
      %v748 = vand.u32 %v157, 4294901760
      %749 = vmatprep.subr.mxu0 %v748
      %v750 = vand.u32 %v156, 4294901760
      %751 = vmatpush1.msra.mxu0 %v750
      %v752 = vand.u32 %v159, 4294901760
      %753 = vmatprep.subr.mxu0 %v752
      %v754 = vand.u32 %v158, 4294901760
      %755 = vmatpush1.msra.mxu0 %v754
      %756 = vmatprep.subr.mxu0 0.0
      %757 = vmatpush1.msra.mxu0 0.0
      %758 = vmatprep.subr.mxu0 0.0
      %759 = vmatpush1.msra.mxu0 0.0
      %760 = vmatprep.subr.mxu0 0.0
      %761 = vmatpush1.msra.mxu0 0.0
      %762 = vmatprep.subr.mxu0 0.0
      %763 = vmatpush1.msra.mxu0 0.0
      %764 = vmatprep.subr.mxu0 0.0
      %765 = vmatpush1.msra.mxu0 0.0
      %766 = vmatprep.subr.mxu0 0.0
      %767 = vmatpush1.msra.mxu0 0.0
      %768 = vmatprep.subr.mxu0 0.0
      %769 = vmatpush1.msra.mxu0 0.0
      %770 = vmatprep.subr.mxu0 0.0
      %771 = vmatpush1.msra.mxu0 0.0
      %772 = vmatprep.subr.mxu0 0.0
      %773 = vmatpush1.msra.mxu0 0.0
      %774 = vmatprep.subr.mxu0 0.0
      %775 = vmatpush1.msra.mxu0 0.0
      %776 = vmatprep.subr.mxu0 0.0
      %777 = vmatpush1.msra.mxu0 0.0
      %778 = vmatprep.subr.mxu0 0.0
      %779 = vmatpush1.msra.mxu0 0.0
      %780 = vmatprep.subr.mxu0 0.0
      %781 = vmatpush1.msra.mxu0 0.0
      %782 = vmatprep.subr.mxu0 0.0
      %783 = vmatpush1.msra.mxu0 0.0
      %784 = vmatprep.subr.mxu0 0.0
      %785 = vmatpush1.msra.mxu0 0.0
      %786 = vmatprep.subr.mxu0 0.0
      %787 = vmatpush1.msra.mxu0 0.0
      %788 = vmatprep.subr.mxu0 0.0
      %789 = vmatpush1.msra.mxu0 0.0
      %790 = vmatprep.subr.mxu0 0.0
      %791 = vmatpush1.msra.mxu0 0.0
      %792 = vmatprep.subr.mxu0 0.0
      %793 = vmatpush1.msra.mxu0 0.0
      %794 = vmatprep.subr.mxu0 0.0
      %795 = vmatpush1.msra.mxu0 0.0
      %796 = vmatprep.subr.mxu0 0.0
      %797 = vmatpush1.msra.mxu0 0.0
      %798 = vmatprep.subr.mxu0 0.0
      %799 = vmatpush1.msra.mxu0 0.0
      %800 = vmatprep.subr.mxu0 0.0
      %801 = vmatpush1.msra.mxu0 0.0
      %802 = vmatprep.subr.mxu0 0.0
      %803 = vmatpush1.msra.mxu0 0.0
      %804 = vmatprep.mubr.f32.mxu0 0.0
      %v805 = vand.u32 %v170, 4294901760
      %v806 = vsub.f32 %v170, %v805
      %v807 = vand.u32 %v806, 4294901760
      %808 = vmatmul.mubr.f32.gmra.mrb[0].mxu0 %v807
      %v809 = vpop.f32.mrb[0].mxu0
      %v810 = vadd.f32 %v664, %v809
      %v811 = vpop.f32.mrb[0].mxu0
      %v812 = vadd.f32 %v666, %v811
      %813 = vmatprep.mubr.f32.mxu0 0.0
      %v814 = vand.u32 %v173, 4294901760
      %v815 = vsub.f32 %v173, %v814
      %v816 = vand.u32 %v815, 4294901760
      %817 = vmatmul.mubr.f32.gmra.mrb[0].mxu0 %v816
      %v818 = vpop.f32.mrb[0].mxu0
      %v819 = vadd.f32 %v672, %v818
      %v820 = vpop.f32.mrb[0].mxu0
      %v821 = vadd.f32 %v674, %v820
      %822 = vmatprep.mubr.f32.mxu0 0.0
      %v823 = vand.u32 %v176, 4294901760
      %v824 = vsub.f32 %v176, %v823
      %v825 = vand.u32 %v824, 4294901760
      %826 = vmatmul.mubr.f32.gmra.mrb[0].mxu0 %v825
      %v827 = vpop.f32.mrb[0].mxu0
      %v828 = vadd.f32 %v680, %v827
      %v829 = vpop.f32.mrb[0].mxu0
      %v830 = vadd.f32 %v682, %v829
      %831 = vmatprep.mubr.f32.mxu0 0.0
      %v832 = vand.u32 %v179, 4294901760
      %v833 = vsub.f32 %v179, %v832
      %v834 = vand.u32 %v833, 4294901760
      %835 = vmatmul.mubr.f32.gmra.mrb[0].mxu0 %v834
      %v836 = vpop.f32.mrb[0].mxu0
      %v837 = vadd.f32 %v688, %v836
      %v838 = vpop.f32.mrb[0].mxu0
      %v839 = vadd.f32 %v690, %v838
      %840 = vmatprep.mubr.f32.mxu0 0.0
      %v841 = vand.u32 %v182, 4294901760
      %v842 = vsub.f32 %v182, %v841
      %v843 = vand.u32 %v842, 4294901760
      %844 = vmatmul.mubr.f32.gmra.mrb[0].mxu0 %v843
      %v845 = vpop.f32.mrb[0].mxu0
      %v846 = vadd.f32 %v696, %v845
      %v847 = vpop.f32.mrb[0].mxu0
      %v848 = vadd.f32 %v698, %v847
      %849 = vmatprep.mubr.f32.mxu0 0.0
      %v850 = vand.u32 %v185, 4294901760
      %v851 = vsub.f32 %v185, %v850
      %v852 = vand.u32 %v851, 4294901760
      %853 = vmatmul.mubr.f32.gmra.mrb[0].mxu0 %v852
      %v854 = vpop.f32.mrb[0].mxu0
      %v855 = vadd.f32 %v704, %v854
      %v856 = vpop.f32.mrb[0].mxu0
      %v857 = vadd.f32 %v706, %v856
      %858 = vmatprep.mubr.f32.mxu0 0.0
      %v859 = vand.u32 %v188, 4294901760
      %v860 = vsub.f32 %v188, %v859
      %v861 = vand.u32 %v860, 4294901760
      %862 = vmatmul.mubr.f32.gmra.mrb[0].mxu0 %v861
      %v863 = vpop.f32.mrb[0].mxu0
      %v864 = vadd.f32 %v712, %v863
      %v865 = vpop.f32.mrb[0].mxu0
      %v866 = vadd.f32 %v714, %v865
      %867 = vmatprep.mubr.f32.mxu0 0.0
      %v868 = vand.u32 %v191, 4294901760
      %v869 = vsub.f32 %v191, %v868
      %v870 = vand.u32 %v869, 4294901760
      %871 = vmatmul.mubr.f32.gmra.mrb[0].mxu0 %v870
      %v872 = vpop.f32.mrb[0].mxu0
      %v873 = vadd.f32 %v720, %v872
      %v874 = vpop.f32.mrb[0].mxu0
      %v875 = vadd.f32 %v722, %v874
      %876 = vdwg.mxu0
      %v877 = vand.u32 %v145, 4294901760
      %v878 = vsub.f32 %v145, %v877
      %v879 = vand.u32 %v878, 4294901760
      %880 = vmatprep.subr.mxu0 %v879
      %v881 = vand.u32 %v144, 4294901760
      %v882 = vsub.f32 %v144, %v881
      %v883 = vand.u32 %v882, 4294901760
      %884 = vmatpush1.msra.mxu0 %v883
      %v885 = vand.u32 %v147, 4294901760
      %v886 = vsub.f32 %v147, %v885
      %v887 = vand.u32 %v886, 4294901760
      %888 = vmatprep.subr.mxu0 %v887
      %v889 = vand.u32 %v146, 4294901760
      %v890 = vsub.f32 %v146, %v889
      %v891 = vand.u32 %v890, 4294901760
      %892 = vmatpush1.msra.mxu0 %v891
      %v893 = vand.u32 %v149, 4294901760
      %v894 = vsub.f32 %v149, %v893
      %v895 = vand.u32 %v894, 4294901760
      %896 = vmatprep.subr.mxu0 %v895
      %v897 = vand.u32 %v148, 4294901760
      %v898 = vsub.f32 %v148, %v897
      %v899 = vand.u32 %v898, 4294901760
      %900 = vmatpush1.msra.mxu0 %v899
      %v901 = vand.u32 %v151, 4294901760
      %v902 = vsub.f32 %v151, %v901
      %v903 = vand.u32 %v902, 4294901760
      %904 = vmatprep.subr.mxu0 %v903
      %v905 = vand.u32 %v150, 4294901760
      %v906 = vsub.f32 %v150, %v905
      %v907 = vand.u32 %v906, 4294901760
      %908 = vmatpush1.msra.mxu0 %v907
      %v909 = vand.u32 %v153, 4294901760
      %v910 = vsub.f32 %v153, %v909
      %v911 = vand.u32 %v910, 4294901760
      %912 = vmatprep.subr.mxu0 %v911
      %v913 = vand.u32 %v152, 4294901760
      %v914 = vsub.f32 %v152, %v913
      %v915 = vand.u32 %v914, 4294901760
      %916 = vmatpush1.msra.mxu0 %v915
      %v917 = vand.u32 %v155, 4294901760
      %v918 = vsub.f32 %v155, %v917
      %v919 = vand.u32 %v918, 4294901760
      %920 = vmatprep.subr.mxu0 %v919
      %v921 = vand.u32 %v154, 4294901760
      %v922 = vsub.f32 %v154, %v921
      %v923 = vand.u32 %v922, 4294901760
      %924 = vmatpush1.msra.mxu0 %v923
      %v925 = vand.u32 %v157, 4294901760
      %v926 = vsub.f32 %v157, %v925
      %v927 = vand.u32 %v926, 4294901760
      %928 = vmatprep.subr.mxu0 %v927
      %v929 = vand.u32 %v156, 4294901760
      %v930 = vsub.f32 %v156, %v929
      %v931 = vand.u32 %v930, 4294901760
      %932 = vmatpush1.msra.mxu0 %v931
      %v933 = vand.u32 %v159, 4294901760
      %v934 = vsub.f32 %v159, %v933
      %v935 = vand.u32 %v934, 4294901760
      %936 = vmatprep.subr.mxu0 %v935
      %v937 = vand.u32 %v158, 4294901760
      %v938 = vsub.f32 %v158, %v937
      %v939 = vand.u32 %v938, 4294901760
      %940 = vmatpush1.msra.mxu0 %v939
      %941 = vmatprep.subr.mxu0 0.0
      %942 = vmatpush1.msra.mxu0 0.0
      %943 = vmatprep.subr.mxu0 0.0
      %944 = vmatpush1.msra.mxu0 0.0
      %945 = vmatprep.subr.mxu0 0.0
      %946 = vmatpush1.msra.mxu0 0.0
      %947 = vmatprep.subr.mxu0 0.0
      %948 = vmatpush1.msra.mxu0 0.0
      %949 = vmatprep.subr.mxu0 0.0
      %950 = vmatpush1.msra.mxu0 0.0
      %951 = vmatprep.subr.mxu0 0.0
      %952 = vmatpush1.msra.mxu0 0.0
      %953 = vmatprep.subr.mxu0 0.0
      %954 = vmatpush1.msra.mxu0 0.0
      %955 = vmatprep.subr.mxu0 0.0
      %956 = vmatpush1.msra.mxu0 0.0
      %957 = vmatprep.subr.mxu0 0.0
      %958 = vmatpush1.msra.mxu0 0.0
      %959 = vmatprep.subr.mxu0 0.0
      %960 = vmatpush1.msra.mxu0 0.0
      %961 = vmatprep.subr.mxu0 0.0
      %962 = vmatpush1.msra.mxu0 0.0
      %963 = vmatprep.subr.mxu0 0.0
      %964 = vmatpush1.msra.mxu0 0.0
      %965 = vmatprep.subr.mxu0 0.0
      %966 = vmatpush1.msra.mxu0 0.0
      %967 = vmatprep.subr.mxu0 0.0
      %968 = vmatpush1.msra.mxu0 0.0
      %969 = vmatprep.subr.mxu0 0.0
      %970 = vmatpush1.msra.mxu0 0.0
      %971 = vmatprep.subr.mxu0 0.0
      %972 = vmatpush1.msra.mxu0 0.0
      %973 = vmatprep.subr.mxu0 0.0
      %974 = vmatpush1.msra.mxu0 0.0
      %975 = vmatprep.subr.mxu0 0.0
      %976 = vmatpush1.msra.mxu0 0.0
      %977 = vmatprep.subr.mxu0 0.0
      %978 = vmatpush1.msra.mxu0 0.0
      %979 = vmatprep.subr.mxu0 0.0
      %980 = vmatpush1.msra.mxu0 0.0
      %981 = vmatprep.subr.mxu0 0.0
      %982 = vmatpush1.msra.mxu0 0.0
      %983 = vmatprep.subr.mxu0 0.0
      %984 = vmatpush1.msra.mxu0 0.0
      %985 = vmatprep.subr.mxu0 0.0
      %986 = vmatpush1.msra.mxu0 0.0
      %987 = vmatprep.subr.mxu0 0.0
      %988 = vmatpush1.msra.mxu0 0.0
      %989 = vmatprep.mubr.f32.mxu0 0.0
      %v990 = vand.u32 %v170, 4294901760
      %991 = vmatmul.mubr.f32.gmra.mrb[0].mxu0 %v990
      %v992 = vpop.f32.mrb[0].mxu0
      %v993 = vadd.f32 %v810, %v992
      %v994 = vpop.f32.mrb[0].mxu0
      %v995 = vadd.f32 %v812, %v994
      %996 = vmatprep.mubr.f32.mxu0 0.0
      %v997 = vand.u32 %v173, 4294901760
      %998 = vmatmul.mubr.f32.gmra.mrb[0].mxu0 %v997
      %v999 = vpop.f32.mrb[0].mxu0
      %v1000 = vadd.f32 %v819, %v999
      %v1001 = vpop.f32.mrb[0].mxu0
      %v1002 = vadd.f32 %v821, %v1001
      %1003 = vmatprep.mubr.f32.mxu0 0.0
      %v1004 = vand.u32 %v176, 4294901760
      %1005 = vmatmul.mubr.f32.gmra.mrb[0].mxu0 %v1004
      %v1006 = vpop.f32.mrb[0].mxu0
      %v1007 = vadd.f32 %v828, %v1006
      %v1008 = vpop.f32.mrb[0].mxu0
      %v1009 = vadd.f32 %v830, %v1008
      %1010 = vmatprep.mubr.f32.mxu0 0.0
      %v1011 = vand.u32 %v179, 4294901760
      %1012 = vmatmul.mubr.f32.gmra.mrb[0].mxu0 %v1011
      %v1013 = vpop.f32.mrb[0].mxu0
      %v1014 = vadd.f32 %v837, %v1013
      %v1015 = vpop.f32.mrb[0].mxu0
      %v1016 = vadd.f32 %v839, %v1015
      %1017 = vmatprep.mubr.f32.mxu0 0.0
      %v1018 = vand.u32 %v182, 4294901760
      %1019 = vmatmul.mubr.f32.gmra.mrb[0].mxu0 %v1018
      %v1020 = vpop.f32.mrb[0].mxu0
      %v1021 = vadd.f32 %v846, %v1020
      %v1022 = vpop.f32.mrb[0].mxu0
      %v1023 = vadd.f32 %v848, %v1022
      %1024 = vmatprep.mubr.f32.mxu0 0.0
      %v1025 = vand.u32 %v185, 4294901760
      %1026 = vmatmul.mubr.f32.gmra.mrb[0].mxu0 %v1025
      %v1027 = vpop.f32.mrb[0].mxu0
      %v1028 = vadd.f32 %v855, %v1027
      %v1029 = vpop.f32.mrb[0].mxu0
      %v1030 = vadd.f32 %v857, %v1029
      %1031 = vmatprep.mubr.f32.mxu0 0.0
      %v1032 = vand.u32 %v188, 4294901760
      %1033 = vmatmul.mubr.f32.gmra.mrb[0].mxu0 %v1032
      %v1034 = vpop.f32.mrb[0].mxu0
      %v1035 = vadd.f32 %v864, %v1034
      %v1036 = vpop.f32.mrb[0].mxu0
      %v1037 = vadd.f32 %v866, %v1036
      %1038 = vmatprep.mubr.f32.mxu0 0.0
      %v1039 = vand.u32 %v191, 4294901760
      %1040 = vmatmul.mubr.f32.gmra.mrb[0].mxu0 %v1039
      %v1041 = vpop.f32.mrb[0].mxu0
      %v1042 = vadd.f32 %v873, %v1041
      %v1043 = vpop.f32.mrb[0].mxu0
      %v1044 = vadd.f32 %v875, %v1043
      %1045 = vdwg.mxu0
      %v1046 = vand.u32 %v145, 4294901760
      %1047 = vmatprep.subr.mxu0 %v1046
      %v1048 = vand.u32 %v144, 4294901760
      %1049 = vmatpush1.msra.mxu0 %v1048
      %v1050 = vand.u32 %v147, 4294901760
      %1051 = vmatprep.subr.mxu0 %v1050
      %v1052 = vand.u32 %v146, 4294901760
      %1053 = vmatpush1.msra.mxu0 %v1052
      %v1054 = vand.u32 %v149, 4294901760
      %1055 = vmatprep.subr.mxu0 %v1054
      %v1056 = vand.u32 %v148, 4294901760
      %1057 = vmatpush1.msra.mxu0 %v1056
      %v1058 = vand.u32 %v151, 4294901760
      %1059 = vmatprep.subr.mxu0 %v1058
      %v1060 = vand.u32 %v150, 4294901760
      %1061 = vmatpush1.msra.mxu0 %v1060
      %v1062 = vand.u32 %v153, 4294901760
      %1063 = vmatprep.subr.mxu0 %v1062
      %v1064 = vand.u32 %v152, 4294901760
      %1065 = vmatpush1.msra.mxu0 %v1064
      %v1066 = vand.u32 %v155, 4294901760
      %1067 = vmatprep.subr.mxu0 %v1066
      %v1068 = vand.u32 %v154, 4294901760
      %1069 = vmatpush1.msra.mxu0 %v1068
      %v1070 = vand.u32 %v157, 4294901760
      %1071 = vmatprep.subr.mxu0 %v1070
      %v1072 = vand.u32 %v156, 4294901760
      %1073 = vmatpush1.msra.mxu0 %v1072
      %v1074 = vand.u32 %v159, 4294901760
      %1075 = vmatprep.subr.mxu0 %v1074
      %v1076 = vand.u32 %v158, 4294901760
      %1077 = vmatpush1.msra.mxu0 %v1076
      %1078 = vmatprep.subr.mxu0 0.0
      %1079 = vmatpush1.msra.mxu0 0.0
      %1080 = vmatprep.subr.mxu0 0.0
      %1081 = vmatpush1.msra.mxu0 0.0
      %1082 = vmatprep.subr.mxu0 0.0
      %1083 = vmatpush1.msra.mxu0 0.0
      %1084 = vmatprep.subr.mxu0 0.0
      %1085 = vmatpush1.msra.mxu0 0.0
      %1086 = vmatprep.subr.mxu0 0.0
      %1087 = vmatpush1.msra.mxu0 0.0
      %1088 = vmatprep.subr.mxu0 0.0
      %1089 = vmatpush1.msra.mxu0 0.0
      %1090 = vmatprep.subr.mxu0 0.0
      %1091 = vmatpush1.msra.mxu0 0.0
      %1092 = vmatprep.subr.mxu0 0.0
      %1093 = vmatpush1.msra.mxu0 0.0
      %1094 = vmatprep.subr.mxu0 0.0
      %1095 = vmatpush1.msra.mxu0 0.0
      %1096 = vmatprep.subr.mxu0 0.0
      %1097 = vmatpush1.msra.mxu0 0.0
      %1098 = vmatprep.subr.mxu0 0.0
      %1099 = vmatpush1.msra.mxu0 0.0
      %1100 = vmatprep.subr.mxu0 0.0
      %1101 = vmatpush1.msra.mxu0 0.0
      %1102 = vmatprep.subr.mxu0 0.0
      %1103 = vmatpush1.msra.mxu0 0.0
      %1104 = vmatprep.subr.mxu0 0.0
      %1105 = vmatpush1.msra.mxu0 0.0
      %1106 = vmatprep.subr.mxu0 0.0
      %1107 = vmatpush1.msra.mxu0 0.0
      %1108 = vmatprep.subr.mxu0 0.0
      %1109 = vmatpush1.msra.mxu0 0.0
      %1110 = vmatprep.subr.mxu0 0.0
      %1111 = vmatpush1.msra.mxu0 0.0
      %1112 = vmatprep.subr.mxu0 0.0
      %1113 = vmatpush1.msra.mxu0 0.0
      %1114 = vmatprep.subr.mxu0 0.0
      %1115 = vmatpush1.msra.mxu0 0.0
      %1116 = vmatprep.subr.mxu0 0.0
      %1117 = vmatpush1.msra.mxu0 0.0
      %1118 = vmatprep.subr.mxu0 0.0
      %1119 = vmatpush1.msra.mxu0 0.0
      %1120 = vmatprep.subr.mxu0 0.0
      %1121 = vmatpush1.msra.mxu0 0.0
      %1122 = vmatprep.subr.mxu0 0.0
      %1123 = vmatpush1.msra.mxu0 0.0
      %1124 = vmatprep.subr.mxu0 0.0
      %1125 = vmatpush1.msra.mxu0 0.0
      %1126 = vmatprep.mubr.f32.mxu0 0.0
      %v1127 = vand.u32 %v170, 4294901760
      %1128 = vmatmul.mubr.f32.gmra.mrb[0].mxu0 %v1127
      %v1129 = vpop.f32.mrb[0].mxu0
      %v1130 = vadd.f32 %v993, %v1129
      %v1131 = vpop.f32.mrb[0].mxu0
      %v1132 = vadd.f32 %v995, %v1131
      %1133 = vmatprep.mubr.f32.mxu0 0.0
      %v1134 = vand.u32 %v173, 4294901760
      %1135 = vmatmul.mubr.f32.gmra.mrb[0].mxu0 %v1134
      %v1136 = vpop.f32.mrb[0].mxu0
      %v1137 = vadd.f32 %v1000, %v1136
      %v1138 = vpop.f32.mrb[0].mxu0
      %v1139 = vadd.f32 %v1002, %v1138
      %1140 = vmatprep.mubr.f32.mxu0 0.0
      %v1141 = vand.u32 %v176, 4294901760
      %1142 = vmatmul.mubr.f32.gmra.mrb[0].mxu0 %v1141
      %v1143 = vpop.f32.mrb[0].mxu0
      %v1144 = vadd.f32 %v1007, %v1143
      %v1145 = vpop.f32.mrb[0].mxu0
      %v1146 = vadd.f32 %v1009, %v1145
      %1147 = vmatprep.mubr.f32.mxu0 0.0
      %v1148 = vand.u32 %v179, 4294901760
      %1149 = vmatmul.mubr.f32.gmra.mrb[0].mxu0 %v1148
      %v1150 = vpop.f32.mrb[0].mxu0
      %v1151 = vadd.f32 %v1014, %v1150
      %v1152 = vpop.f32.mrb[0].mxu0
      %v1153 = vadd.f32 %v1016, %v1152
      %1154 = vmatprep.mubr.f32.mxu0 0.0
      %v1155 = vand.u32 %v182, 4294901760
      %1156 = vmatmul.mubr.f32.gmra.mrb[0].mxu0 %v1155
      %v1157 = vpop.f32.mrb[0].mxu0
      %v1158 = vadd.f32 %v1021, %v1157
      %v1159 = vpop.f32.mrb[0].mxu0
      %v1160 = vadd.f32 %v1023, %v1159
      %1161 = vmatprep.mubr.f32.mxu0 0.0
      %v1162 = vand.u32 %v185, 4294901760
      %1163 = vmatmul.mubr.f32.gmra.mrb[0].mxu0 %v1162
      %v1164 = vpop.f32.mrb[0].mxu0
      %v1165 = vadd.f32 %v1028, %v1164
      %v1166 = vpop.f32.mrb[0].mxu0
      %v1167 = vadd.f32 %v1030, %v1166
      %1168 = vmatprep.mubr.f32.mxu0 0.0
      %v1169 = vand.u32 %v188, 4294901760
      %1170 = vmatmul.mubr.f32.gmra.mrb[0].mxu0 %v1169
      %v1171 = vpop.f32.mrb[0].mxu0
      %v1172 = vadd.f32 %v1035, %v1171
      %v1173 = vpop.f32.mrb[0].mxu0
      %v1174 = vadd.f32 %v1037, %v1173
      %1175 = vmatprep.mubr.f32.mxu0 0.0
      %v1176 = vand.u32 %v191, 4294901760
      %1177 = vmatmul.mubr.f32.gmra.mrb[0].mxu0 %v1176
      %v1178 = vpop.f32.mrb[0].mxu0
      %v1179 = vadd.f32 %v1042, %v1178
      %v1180 = vpop.f32.mrb[0].mxu0
      %v1181 = vadd.f32 %v1044, %v1180
      %1182 = vdwg.mxu0
      %v1183 = vadd.f32 %v1130, %v1132
      %1184 = vadd.xlane.f32.xlu0 %v1183
      %v1185 = vpop.xlane.xlu0 %1184
      %v1186 = vadd.f32 %v1137, %v1139
      %1187 = vadd.xlane.f32.xlu0 %v1186
      %v1188 = vpop.xlane.xlu0 %1187
      %v1189 = vadd.f32 %v1144, %v1146
      %1190 = vadd.xlane.f32.xlu0 %v1189
      %v1191 = vpop.xlane.xlu0 %1190
      %v1192 = vadd.f32 %v1151, %v1153
      %1193 = vadd.xlane.f32.xlu0 %v1192
      %v1194 = vpop.xlane.xlu0 %1193
      %v1195 = vadd.f32 %v1158, %v1160
      %1196 = vadd.xlane.f32.xlu0 %v1195
      %v1197 = vpop.xlane.xlu0 %1196
      %v1198 = vadd.f32 %v1165, %v1167
      %1199 = vadd.xlane.f32.xlu0 %v1198
      %v1200 = vpop.xlane.xlu0 %1199
      %v1201 = vadd.f32 %v1172, %v1174
      %1202 = vadd.xlane.f32.xlu0 %v1201
      %v1203 = vpop.xlane.xlu0 %1202
      %v1204 = vadd.f32 %v1179, %v1181
      %1205 = vadd.xlane.f32.xlu0 %v1204
      %v1206 = vpop.xlane.xlu0 %1205
      %v1207 = vsub.f32 0.0, %v1185
      %v1208 = vsub.f32 0.0, %v1188
      %v1209 = vsub.f32 0.0, %v1191
      %v1210 = vsub.f32 0.0, %v1194
      %v1211 = vsub.f32 0.0, %v1197
      %v1212 = vsub.f32 0.0, %v1200
      %v1213 = vsub.f32 0.0, %v1203
      %v1214 = vsub.f32 0.0, %v1206
      %v1215 = vmul.f32 %v1207, 1.442695
      %v1216 = vpow.pop %v1215
      %v1217 = vmul.f32 %v1208, 1.442695
      %v1218 = vpow.pop %v1217
      %v1219 = vmul.f32 %v1209, 1.442695
      %v1220 = vpow.pop %v1219
      %v1221 = vmul.f32 %v1210, 1.442695
      %v1222 = vpow.pop %v1221
      %v1223 = vmul.f32 %v1211, 1.442695
      %v1224 = vpow.pop %v1223
      %v1225 = vmul.f32 %v1212, 1.442695
      %v1226 = vpow.pop %v1225
      %v1227 = vmul.f32 %v1213, 1.442695
      %v1228 = vpow.pop %v1227
      %v1229 = vmul.f32 %v1214, 1.442695
      %v1230 = vpow.pop %v1229
      %v1231 = vadd.f32 %v1216, 1.0
      %v1232 = vadd.f32 %v1218, 1.0
      %v1233 = vadd.f32 %v1220, 1.0
      %v1234 = vadd.f32 %v1222, 1.0
      %v1235 = vadd.f32 %v1224, 1.0
      %v1236 = vadd.f32 %v1226, 1.0
      %v1237 = vadd.f32 %v1228, 1.0
      %v1238 = vadd.f32 %v1230, 1.0
      %v1239 = vrcp.pop %v1231
      %v1240 = vmul.f32 1.0, %v1239
      %v1241 = vrcp.pop %v1232
      %v1242 = vmul.f32 1.0, %v1241
      %v1243 = vrcp.pop %v1233
      %v1244 = vmul.f32 1.0, %v1243
      %v1245 = vrcp.pop %v1234
      %v1246 = vmul.f32 1.0, %v1245
      %v1247 = vrcp.pop %v1235
      %v1248 = vmul.f32 1.0, %v1247
      %v1249 = vrcp.pop %v1236
      %v1250 = vmul.f32 1.0, %v1249
      %v1251 = vrcp.pop %v1237
      %v1252 = vmul.f32 1.0, %v1251
      %v1253 = vrcp.pop %v1238
      %v1254 = vmul.f32 1.0, %v1253
      %v1255 = vmul.f32 %v144, %v1240
      %v1256 = vmul.f32 %v145, %v1240
      %v1257 = vmul.f32 %v146, %v1242
      %v1258 = vmul.f32 %v147, %v1242
      %v1259 = vmul.f32 %v148, %v1244
      %v1260 = vmul.f32 %v149, %v1244
      %v1261 = vmul.f32 %v150, %v1246
      %v1262 = vmul.f32 %v151, %v1246
      %v1263 = vmul.f32 %v152, %v1248
      %v1264 = vmul.f32 %v153, %v1248
      %v1265 = vmul.f32 %v154, %v1250
      %v1266 = vmul.f32 %v155, %v1250
      %v1267 = vmul.f32 %v156, %v1252
      %v1268 = vmul.f32 %v157, %v1252
      %v1269 = vmul.f32 %v158, %v1254
      %v1270 = vmul.f32 %v159, %v1254
      %1271 = vst [vmem:[%s143] sm:$0xff] %v1255
      %1272 = vst [vmem:[%s143 + $0x8] sm:$0xff] %v1256
      %1273 = vst [vmem:[%s143 + $0x10] sm:$0xff] %v1257
      %1274 = vst [vmem:[%s143 + $0x18] sm:$0xff] %v1258
      %1275 = vst [vmem:[%s143 + $0x20] sm:$0xff] %v1259
      %1276 = vst [vmem:[%s143 + $0x28] sm:$0xff] %v1260
      %1277 = vst [vmem:[%s143 + $0x30] sm:$0xff] %v1261
      %1278 = vst [vmem:[%s143 + $0x38] sm:$0xff] %v1262
      %1279 = vst [vmem:[%s143 + $0x40] sm:$0xff] %v1263
      %1280 = vst [vmem:[%s143 + $0x48] sm:$0xff] %v1264
      %1281 = vst [vmem:[%s143 + $0x50] sm:$0xff] %v1265
      %1282 = vst [vmem:[%s143 + $0x58] sm:$0xff] %v1266
      %1283 = vst [vmem:[%s143 + $0x60] sm:$0xff] %v1267
      %1284 = vst [vmem:[%s143 + $0x68] sm:$0xff] %v1268
      %1285 = vst [vmem:[%s143 + $0x70] sm:$0xff] %v1269
      %1286 = vst [vmem:[%s143 + $0x78] sm:$0xff] %v1270
      %p1287 = scmp.lt.s32.totalorder %s13, 1
      %s1288 = scalar_select %p1287, %s13, 1
      %s1289 = smul.addr %s1288, 16
      %s1290 = smul.addr %s1289, 8
      %s1291 = scalar_lea.vmem %s2, %s1290
      // Predicated region
      $region29: #{efficient_eca.1} parent=27 // pred_check
        %p1292 = pneg %p78
      $region30: #{efficient_eca.1} parent=27 // pred_check_branch
        %1294 = sbr.rel (%p1292) target = $region32
      $region31: #{efficient_eca.1} parent=27 // pred_region
        _
      $region32: #{efficient_eca.1} parent=27 // pred_fallthru
        _
    $region28: #{efficient_eca.1} parent=5 // pred_fallthru
      _
    %p1295 = scmp.le.s32.totalorder 2, %s8
    // Predicated region
    $region33: #{efficient_eca.1} parent=5 // pred_check
      %p1296 = pneg %p1295
    $region34: #{efficient_eca.1} parent=5 // pred_check_branch
      %1298 = sbr.rel (%p1296) target = $region36
    $region35: #{efficient_eca.1} parent=5 // pred_region
      %s1299 = ssub.s32 %s8, 2
      // Predicated region
      $region37: #{efficient_eca.1} parent=35 // pred_check
        %p1300 = pneg %p84
      $region38: #{efficient_eca.1} parent=35 // pred_check_branch
        %1302 = sbr.rel (%p1300) target = $region40
      $region39: #{efficient_eca.1} parent=35 // pred_region
        %p1303 = scmp.lt.s32.totalorder %s14, 1
        %s1304 = scalar_select %p1303, %s14, 1
        %s1305 = smul.addr %s1304, 16
        %s1306 = smul.addr %s1305, 8
        %s1307 = scalar_lea.vmem %s2, %s1306
      $region40: #{efficient_eca.1} parent=35 // pred_fallthru
        _
    $region36: #{efficient_eca.1} parent=5 // pred_fallthru
      _
  $region6: #{efficient_eca.1} parent=0 // loop_footer
    %s12 = sadd.s32 1, %s8
  $region7: #{efficient_eca.1} parent=0 // loop_footer_branch
    %7 = sbr.rel target = $region3
  $region8: #{efficient_eca.1} parent=0 // loop_exit
    _

</llo_original>
